<compile_context>
chip_gen: v7x
topology: tpu7x:2x2x1
jax: 0.10.0
libtpu: 0.0.40
codegen_flags: <defaults>
</compile_context>

<pallas_src>
from typing import NamedTuple

import jax
import jax.numpy as jnp
from jax.experimental import pallas as pl
from jax.experimental.pallas import tpu as pltpu

LN_EPS = 1e-5  # nn.LayerNorm default
_MIB = 1024 * 1024


def _cdiv(a, b):
    return (a + b - 1) // b


def _round_up(x, m):
    return _cdiv(x, m) * m


def _vmem_capacity_bytes():
    """Per-core VMEM capacity; conservative 64 MiB (v7x) fallback if the query fails."""
    try:
        info = pltpu.get_tpu_info()
        cap = getattr(info, "vmem_capacity_bytes", None)
        if cap:
            return int(cap)
    except Exception:
        pass
    return 64 * _MIB


class _Plan(NamedTuple):
    d_pad: int
    tm: int
    tk: int
    use_ksplit: bool
    single_buffer: bool


def _plan(m, d, single_buffer, force_ksplit=False, tm_cap=512):
    """Choose tiling from the per-chip VMEM budget (generation-aware)."""
    d_pad = _round_up(d, 128)
    budget = _vmem_capacity_bytes() - 8 * _MIB  # headroom
    w_bufs = 1 if single_buffer else 2
    w_bytes = w_bufs * d_pad * d_pad * 2  # resident bf16 weight incl. buffering
    use_ksplit = force_ksplit or (w_bytes > budget // 2)

    if not use_ksplit:
        tk = d_pad
        # per row of tile: double-buffered in/out tiles + ~3 f32 LN intermediates (h/centered/normed)
        per_row = (2 + 2 + 3) * d_pad * 4
        tm = (budget - w_bytes) // per_row
    else:
        cands = [t for t in (512, 256, 128) if d_pad % t == 0 and t < d_pad]
        tk = cands[0] if cands else d_pad
        w_tile = 2 * tk * d_pad * 2  # double-buffered bf16 weight K-slices
        # x K-slices + x full rows + out tiles (double-buffered) + accumulator + LN temps
        per_row = (2 + 2 + 1 + 2) * d_pad * 4 + 2 * tk * 4
        tm = (budget - w_tile) // per_row

    tm = min(tm, tm_cap)
    if m > 8:
        # keep >= 2 row blocks so the "parallel" axis can occupy both v7x TensorCores
        tm = min(tm, _round_up(_cdiv(m, 2), 8))
    if m >= 8:
        tm = max(8, (min(tm, _round_up(m, 8)) // 8) * 8)
    else:
        tm = m  # tiny M: block equals full dim (allowed by the (8,128) rule)
    return _Plan(int(d_pad), int(tm), int(tk), bool(use_ksplit), bool(single_buffer))


def _ln_residual(h, x_f32, gamma, beta, inv_d, use_mean_sq):
    """f32 LayerNorm (biased variance, torch semantics) + residual add."""
    mean = jnp.sum(h, axis=-1, keepdims=True) * inv_d
    if use_mean_sq:
        # Padded lanes of h are exactly 0 (zero-padded W columns / bias), so both sums
        # already run over the true D; avoids the iota/compare/select mask.
        var = jnp.maximum(jnp.sum(h * h, axis=-1, keepdims=True) * inv_d - mean * mean, 0.0)
    else:
        centered = h - mean
        var = jnp.sum(centered * centered, axis=-1, keepdims=True) * inv_d
    y = (h - mean) * jax.lax.rsqrt(var + LN_EPS) * gamma + beta
    # TODO(synk): dropout applied as identity (eval mode).
    return x_f32 + y


def _make_resident_kernel(d_actual, d_pad):
    """Fused Linear -> LayerNorm -> residual with the whole (Dp, Dp) weight resident."""
    use_sq = d_actual != d_pad
    inv_d = 1.0 / float(d_actual)

    def kernel(x_ref, w_ref, b_ref, g_ref, bt_ref, o_ref):
        x = x_ref[...]
        h = jnp.dot(x.astype(jnp.bfloat16), w_ref[...],
                    preferred_element_type=jnp.float32) + b_ref[...]
        out = _ln_residual(h, x.astype(jnp.float32), g_ref[...], bt_ref[...], inv_d, use_sq)
        o_ref[...] = out.astype(o_ref.dtype)

    return kernel


def _make_ksplit_kernel(d_actual, d_pad):
    """K-split variant: (tk, Dp) weight slices + f32 accumulator, finalize at k == last."""
    use_sq = d_actual != d_pad
    inv_d = 1.0 / float(d_actual)

    def kernel(xk_ref, xf_ref, w_ref, b_ref, g_ref, bt_ref, o_ref, acc_ref):
        k = pl.program_id(1)

        @pl.when(k == 0)
        def _init():
            acc_ref[...] = jnp.zeros_like(acc_ref)

        acc_ref[...] += jnp.dot(xk_ref[...].astype(jnp.bfloat16), w_ref[...],
                                preferred_element_type=jnp.float32)

        @pl.when(k == pl.num_programs(1) - 1)
        def _finalize():
            h = acc_ref[...] + b_ref[...]
            x_f32 = xf_ref[...].astype(jnp.float32)
            out = _ln_residual(h, x_f32, g_ref[...], bt_ref[...], inv_d, use_sq)
            o_ref[...] = out.astype(o_ref.dtype)

    return kernel


def _residual_impl(x, w, b, gamma, beta, plan, alias_input):
    B, S, D = x.shape
    M = B * S
    Dp, tm, tk = plan.d_pad, plan.tm, plan.tk
    grid_m = _cdiv(M, tm)
    x_bytes = x.dtype.itemsize

    x2 = x.reshape(M, D)                  # free bitcast; no HBM pass
    wt = w.T.astype(jnp.bfloat16)         # one-time O(D^2) cast; h = x @ w.T

    def _prep_vec(v):
        return v.astype(jnp.float32).reshape(1, D)

    b2, g2, bt2 = _prep_vec(b), _prep_vec(gamma), _prep_vec(beta)

    if Dp != D:
        # Only pad when the feature dim is not lane-dense already.
        x2 = jnp.pad(x2, ((0, 0), (0, Dp - D)))
        wt = jnp.pad(wt, ((0, Dp - D), (0, Dp - D)))
        b2, g2, bt2 = [jnp.pad(v, ((0, 0), (0, Dp - D))) for v in (b2, g2, bt2)]

    def _inv_spec(shape, index_map):
        # Grid-invariant operand: single buffer (double buffering only wastes VMEM).
        if plan.single_buffer:
            return pl.BlockSpec(shape, index_map, pipeline_mode=pl.Buffered(1))
        return pl.BlockSpec(shape, index_map)

    if not plan.use_ksplit:
        kernel = _make_resident_kernel(D, Dp)
        grid = (grid_m,)
        dim_sem = ("parallel",)
        in_specs = [
            pl.BlockSpec((tm, Dp), lambda i: (i, 0)),   # x row tile
            _inv_spec((Dp, Dp), lambda i: (0, 0)),      # resident weight
            _inv_spec((1, Dp), lambda i: (0, 0)),       # linear bias
            _inv_spec((1, Dp), lambda i: (0, 0)),       # ln gamma
            _inv_spec((1, Dp), lambda i: (0, 0)),       # ln beta
        ]
        out_spec = pl.BlockSpec((tm, Dp), lambda i: (i, 0))
        operands = (x2, wt, b2, g2, bt2)
        scratch = []
        w_bufs = 1 if plan.single_buffer else 2
        needed = (w_bufs * Dp * Dp * 2
                  + 2 * tm * Dp * x_bytes      # double-buffered x tiles
                  + 2 * tm * Dp * x_bytes      # double-buffered out tiles
                  + 3 * tm * Dp * 4            # h / centered / normed f32 temporaries
                  + 6 * Dp * 4)
        x_read_passes = 1
    else:
        grid_k = Dp // tk
        kernel = _make_ksplit_kernel(D, Dp)
        grid = (grid_m, grid_k)
        dim_sem = ("parallel", "arbitrary")    # K (reduction) axis last
        in_specs = [
            pl.BlockSpec((tm, tk), lambda i, k: (i, k)),   # x K-slices for the matmul
            pl.BlockSpec((tm, Dp), lambda i, k: (i, 0)),   # x full rows for the residual
            pl.BlockSpec((tk, Dp), lambda i, k: (k, 0)),   # weight K-slices
            _inv_spec((1, Dp), lambda i, k: (0, 0)),       # linear bias
            _inv_spec((1, Dp), lambda i, k: (0, 0)),       # ln gamma
            _inv_spec((1, Dp), lambda i, k: (0, 0)),       # ln beta
        ]
        out_spec = pl.BlockSpec((tm, Dp), lambda i, k: (i, 0))
        operands = (x2, x2, wt, b2, g2, bt2)
        scratch = [pltpu.VMEM((tm, Dp), jnp.float32)]
        needed = (2 * tk * Dp * 2              # double-buffered weight K-slices
                  + 2 * tm * tk * x_bytes      # x K-slices
                  + 2 * tm * Dp * x_bytes      # x full rows
                  + 2 * tm * Dp * x_bytes      # out tiles
                  + tm * Dp * 4                # accumulator scratch
                  + 2 * tm * Dp * 4            # finalize LN temporaries
                  + 6 * Dp * 4)
        x_read_passes = 2

    cap = _vmem_capacity_bytes()
    vmem_limit = int(max(32 * _MIB, min(needed + 16 * _MIB, cap - 8 * _MIB)))

    cost = pl.CostEstimate(
        flops=2 * M * Dp * Dp,
        transcendentals=M,  # one rsqrt per row
        bytes_accessed=(x_read_passes + 1) * M * Dp * x_bytes + Dp * Dp * 2 + 3 * Dp * 4,
    )

    out = pl.pallas_call(
        kernel,
        out_shape=jax.ShapeDtypeStruct((M, Dp), x.dtype),
        grid_spec=pltpu.PrefetchScalarGridSpec(
            num_scalar_prefetch=0,
            grid=grid,
            in_specs=in_specs,
            out_specs=out_spec,
            scratch_shapes=scratch,
        ),
        compiler_params=pltpu.CompilerParams(
            dimension_semantics=dim_sem,
            vmem_limit_bytes=vmem_limit,
        ),
        cost_estimate=cost,
        input_output_aliases={0: 0} if alias_input else {},
    )(*operands)

    if Dp != D:
        out = out[:, :D]
    return out.reshape(B, S, D)


_residual_jit = jax.jit(_residual_impl, static_argnames=("plan", "alias_input"))
_residual_jit_donated = jax.jit(_residual_impl, static_argnames=("plan", "alias_input"),
                                donate_argnums=(0,))


def residual_forward(x, w, b, gamma, beta, *, donate_x=False, force_ksplit=False):
    """out = x + LayerNorm(x @ w.T + b); dropout = identity (eval mode).

    x: (B, S, D) f32 or bf16; w: (D, D) nn.Linear weight (out, in); b, gamma, beta: (D,).
    donate_x=True lets the kernel write in place over x's buffer on the lane-dense fast path.
    """
    B, S, D = x.shape
    M = B * S
    last_err = None
    for single_buffer in (True, False):  # fall back if pipeline_mode=pl.Buffered(1) is unsupported
        plan = _plan(M, D, single_buffer, force_ksplit=force_ksplit)
        padded = plan.d_pad != D
        # Never alias a non-donated parameter (XLA would insert a defensive full copy).
        alias_input = padded or donate_x
        call = _residual_jit_donated if (donate_x and not padded) else _residual_jit
        try:
            return call(x, w, b, gamma, beta, plan=plan, alias_input=alias_input)
        except Exception as e:
            last_err = e
    raise last_err


def residual_reference(x, w, b, gamma, beta):
    # Matches the kernel numerics: bf16 matmul operands, f32 accumulate, f32 LN + residual.
    h = jnp.einsum("bsd,ed->bse", x.astype(jnp.bfloat16), w.astype(jnp.bfloat16),
                   preferred_element_type=jnp.float32) + b.astype(jnp.float32)
    mean = jnp.mean(h, axis=-1, keepdims=True)
    var = jnp.mean((h - mean) ** 2, axis=-1, keepdims=True)
    y = (h - mean) * jax.lax.rsqrt(var + LN_EPS) * gamma.astype(jnp.float32) + beta.astype(jnp.float32)
    return (x.astype(jnp.float32) + y).astype(x.dtype)


if __name__ == "__main__":
    def make_inputs(key, B, S, D):
        kx, kw, kb, kg, kt = jax.random.split(key, 5)
        x = jax.random.normal(kx, (B, S, D), dtype=jnp.float32)
        bound = 1.0 / (D ** 0.5)
        w = jax.random.uniform(kw, (D, D), minval=-bound, maxval=bound, dtype=jnp.float32)
        b = jax.random.uniform(kb, (D,), minval=-bound, maxval=bound, dtype=jnp.float32)
        gamma = 1.0 + 0.1 * jax.random.normal(kg, (D,), dtype=jnp.float32)
        beta = 0.1 * jax.random.normal(kt, (D,), dtype=jnp.float32)
        return x, w, b, gamma, beta

    key = jax.random.PRNGKey(0)
    cases = [
        (2, 8, 32, False),   # D not a multiple of 128 -> padded-feature path (E[h^2] variance)
        (2, 8, 128, False),  # lane-dense fast path: no pad, no slice
        (2, 8, 256, True),   # forced K-split path (tk=128, 2 K steps) for coverage
    ]
    for idx, (B, S, D, force_ks) in enumerate(cases):
        key, sub = jax.random.split(key)
        x, w, b, gamma, beta = make_inputs(sub, B, S, D)
        out = residual_forward(x, w, b, gamma, beta, force_ksplit=force_ks)
        jax.block_until_ready(out)
        ref = residual_reference(x, w, b, gamma, beta)
        assert out.shape == (B, S, D), f"bad output shape (case {idx})"
        assert jnp.allclose(out, ref, atol=2e-3, rtol=2e-3), f"mismatch vs reference (case {idx})"

    print("KERNEL_OK")
</pallas_src>

<mosaic_0001>
module attributes {stable_mosaic.version = 11 : i64} {
  func.func @kernel(%arg0: i32, %arg1: memref<8x128xf32, #tpu.memory_space<vmem>>, %arg2: memref<128x128xbf16, #tpu.memory_space<vmem>>, %arg3: memref<1x128xf32, #tpu.memory_space<vmem>>, %arg4: memref<1x128xf32, #tpu.memory_space<vmem>>, %arg5: memref<1x128xf32, #tpu.memory_space<vmem>>, %arg6: memref<8x128xf32, #tpu.memory_space<vmem>>) attributes {dimension_semantics = [#tpu.dimension_semantics<parallel>], iteration_bounds = array<i64: 2>, scalar_prefetch = 0 : i64, scratch_operands = 0 : i64, tpu.core_type = #tpu.core_type<tc>, window_params = [{transform_indices = @transform_0, window_bounds = array<i64: 8, 128>}, {pipeline_mode = #tpu.pipeline_mode<synchronous>, transform_indices = @transform_1, window_bounds = array<i64: 128, 128>}, {pipeline_mode = #tpu.pipeline_mode<synchronous>, transform_indices = @transform_2, window_bounds = array<i64: 1, 128>}, {pipeline_mode = #tpu.pipeline_mode<synchronous>, transform_indices = @transform_3, window_bounds = array<i64: 1, 128>}, {pipeline_mode = #tpu.pipeline_mode<synchronous>, transform_indices = @transform_4, window_bounds = array<i64: 1, 128>}, {transform_indices = @transform_5, window_bounds = array<i64: 8, 128>}]} {
    %c0 = arith.constant 0 : index
    %c0_0 = arith.constant 0 : index
    %0 = vector.load %arg1[%c0, %c0_0] : memref<8x128xf32, #tpu.memory_space<vmem>>, vector<8x128xf32>
    %1 = arith.truncf %0 : vector<8x128xf32> to vector<8x128xbf16>
    %c0_1 = arith.constant 0 : index
    %c0_2 = arith.constant 0 : index
    %2 = vector.load %arg2[%c0_1, %c0_2] : memref<128x128xbf16, #tpu.memory_space<vmem>>, vector<128x128xbf16>
    %cst = arith.constant dense<0.000000e+00> : vector<8x128xf32>
    %3 = tpu.matmul %1, %2, %cst {dimension_numbers = #tpu.dot_dimension_numbers<[1], [0], [0], [1], [0, 0, 1, 1], [], []>} : vector<8x128xbf16>, vector<128x128xbf16>, vector<8x128xf32> -> vector<8x128xf32>
    %c0_3 = arith.constant 0 : index
    %c0_4 = arith.constant 0 : index
    %4 = vector.load %arg3[%c0_3, %c0_4] : memref<1x128xf32, #tpu.memory_space<vmem>>, vector<1x128xf32>
    %5 = vector.broadcast %4 : vector<1x128xf32> to vector<8x128xf32>
    %6 = arith.addf %3, %5 : vector<8x128xf32>
    %c0_5 = arith.constant 0 : index
    %c0_6 = arith.constant 0 : index
    %7 = vector.load %arg4[%c0_5, %c0_6] : memref<1x128xf32, #tpu.memory_space<vmem>>, vector<1x128xf32>
    %c0_7 = arith.constant 0 : index
    %c0_8 = arith.constant 0 : index
    %8 = vector.load %arg5[%c0_7, %c0_8] : memref<1x128xf32, #tpu.memory_space<vmem>>, vector<1x128xf32>
    %cst_9 = arith.constant dense<0.000000e+00> : vector<8xf32>
    %9 = vector.multi_reduction <add>, %6, %cst_9 [1] : vector<8x128xf32> to vector<8xf32>
    %10 = vector.shape_cast %9 : vector<8xf32> to vector<8x1xf32>
    %cst_10 = arith.constant 3.125000e-02 : f32
    %11 = vector.broadcast %cst_10 : f32 to vector<8x1xf32>
    %12 = arith.mulf %10, %11 : vector<8x1xf32>
    %13 = arith.mulf %6, %6 : vector<8x128xf32>
    %cst_11 = arith.constant dense<0.000000e+00> : vector<8xf32>
    %14 = vector.multi_reduction <add>, %13, %cst_11 [1] : vector<8x128xf32> to vector<8xf32>
    %15 = vector.shape_cast %14 : vector<8xf32> to vector<8x1xf32>
    %cst_12 = arith.constant 3.125000e-02 : f32
    %16 = vector.broadcast %cst_12 : f32 to vector<8x1xf32>
    %17 = arith.mulf %15, %16 : vector<8x1xf32>
    %18 = arith.mulf %12, %12 : vector<8x1xf32>
    %19 = arith.subf %17, %18 : vector<8x1xf32>
    %cst_13 = arith.constant 0.000000e+00 : f32
    %20 = vector.broadcast %cst_13 : f32 to vector<8x1xf32>
    %21 = arith.maximumf %19, %20 : vector<8x1xf32>
    %22 = vector.broadcast %12 : vector<8x1xf32> to vector<8x128xf32>
    %23 = arith.subf %6, %22 : vector<8x128xf32>
    %cst_14 = arith.constant 9.99999974E-6 : f32
    %24 = vector.broadcast %cst_14 : f32 to vector<8x1xf32>
    %25 = arith.addf %21, %24 : vector<8x1xf32>
    %26 = math.rsqrt %25 : vector<8x1xf32>
    %27 = vector.broadcast %26 : vector<8x1xf32> to vector<8x128xf32>
    %28 = arith.mulf %23, %27 : vector<8x128xf32>
    %29 = vector.broadcast %7 : vector<1x128xf32> to vector<8x128xf32>
    %30 = arith.mulf %28, %29 : vector<8x128xf32>
    %31 = vector.broadcast %8 : vector<1x128xf32> to vector<8x128xf32>
    %32 = arith.addf %30, %31 : vector<8x128xf32>
    %33 = arith.addf %0, %32 : vector<8x128xf32>
    %c0_15 = arith.constant 0 : index
    %c0_16 = arith.constant 0 : index
    %34 = vector.load %arg6[%c0_15, %c0_16] : memref<8x128xf32, #tpu.memory_space<vmem>>, vector<8x128xf32>
    tpu.vector_store %arg6[%c0_15, %c0_16], %33 {strides = array<i32>} : memref<8x128xf32, #tpu.memory_space<vmem>>, vector<8x128xf32>,
    return
  }
  func.func @transform_0(%arg0: i32) -> (i32, i32) {
    %c0_i32 = arith.constant 0 : i32
    %c0_i32_0 = arith.constant 0 : i32
    return %arg0, %c0_i32 : i32, i32
  }
  func.func @transform_1(%arg0: i32) -> (i32, i32) {
    %c0_i32 = arith.constant 0 : i32
    %c0_i32_0 = arith.constant 0 : i32
    %c0_i32_1 = arith.constant 0 : i32
    return %c0_i32, %c0_i32_0 : i32, i32
  }
  func.func @transform_2(%arg0: i32) -> (i32, i32) {
    %c0_i32 = arith.constant 0 : i32
    %c0_i32_0 = arith.constant 0 : i32
    %c0_i32_1 = arith.constant 0 : i32
    return %c0_i32, %c0_i32_0 : i32, i32
  }
  func.func @transform_3(%arg0: i32) -> (i32, i32) {
    %c0_i32 = arith.constant 0 : i32
    %c0_i32_0 = arith.constant 0 : i32
    %c0_i32_1 = arith.constant 0 : i32
    return %c0_i32, %c0_i32_0 : i32, i32
  }
  func.func @transform_4(%arg0: i32) -> (i32, i32) {
    %c0_i32 = arith.constant 0 : i32
    %c0_i32_0 = arith.constant 0 : i32
    %c0_i32_1 = arith.constant 0 : i32
    return %c0_i32, %c0_i32_0 : i32, i32
  }
  func.func @transform_5(%arg0: i32) -> (i32, i32) {
    %c0_i32 = arith.constant 0 : i32
    %c0_i32_0 = arith.constant 0 : i32
    return %arg0, %c0_i32 : i32, i32
  }
}

module attributes {stable_mosaic.version = 11 : i64} {
  func.func @kernel(%arg0: i32, %arg1: memref<8x128xf32, #tpu.memory_space<vmem>>, %arg2: memref<128x128xbf16, #tpu.memory_space<vmem>>, %arg3: memref<1x128xf32, #tpu.memory_space<vmem>>, %arg4: memref<1x128xf32, #tpu.memory_space<vmem>>, %arg5: memref<1x128xf32, #tpu.memory_space<vmem>>, %arg6: memref<8x128xf32, #tpu.memory_space<vmem>>) attributes {dimension_semantics = [#tpu.dimension_semantics<parallel>], iteration_bounds = array<i64: 2>, scalar_prefetch = 0 : i64, scratch_operands = 0 : i64, tpu.core_type = #tpu.core_type<tc>, window_params = [{transform_indices = @transform_0, window_bounds = array<i64: 8, 128>}, {pipeline_mode = #tpu.pipeline_mode<synchronous>, transform_indices = @transform_1, window_bounds = array<i64: 128, 128>}, {pipeline_mode = #tpu.pipeline_mode<synchronous>, transform_indices = @transform_2, window_bounds = array<i64: 1, 128>}, {pipeline_mode = #tpu.pipeline_mode<synchronous>, transform_indices = @transform_3, window_bounds = array<i64: 1, 128>}, {pipeline_mode = #tpu.pipeline_mode<synchronous>, transform_indices = @transform_4, window_bounds = array<i64: 1, 128>}, {transform_indices = @transform_5, window_bounds = array<i64: 8, 128>}]} {
    %c0 = arith.constant 0 : index
    %c0_0 = arith.constant 0 : index
    %0 = vector.load %arg1[%c0, %c0_0] : memref<8x128xf32, #tpu.memory_space<vmem>>, vector<8x128xf32>
    %1 = arith.truncf %0 : vector<8x128xf32> to vector<8x128xbf16>
    %c0_1 = arith.constant 0 : index
    %c0_2 = arith.constant 0 : index
    %2 = vector.load %arg2[%c0_1, %c0_2] : memref<128x128xbf16, #tpu.memory_space<vmem>>, vector<128x128xbf16>
    %cst = arith.constant dense<0.000000e+00> : vector<8x128xf32>
    %3 = tpu.matmul %1, %2, %cst {dimension_numbers = #tpu.dot_dimension_numbers<[1], [0], [0], [1], [0, 0, 1, 1], [], []>} : vector<8x128xbf16>, vector<128x128xbf16>, vector<8x128xf32> -> vector<8x128xf32>
    %c0_3 = arith.constant 0 : index
    %c0_4 = arith.constant 0 : index
    %4 = vector.load %arg3[%c0_3, %c0_4] : memref<1x128xf32, #tpu.memory_space<vmem>>, vector<1x128xf32>
    %5 = vector.broadcast %4 : vector<1x128xf32> to vector<8x128xf32>
    %6 = arith.addf %3, %5 : vector<8x128xf32>
    %c0_5 = arith.constant 0 : index
    %c0_6 = arith.constant 0 : index
    %7 = vector.load %arg4[%c0_5, %c0_6] : memref<1x128xf32, #tpu.memory_space<vmem>>, vector<1x128xf32>
    %c0_7 = arith.constant 0 : index
    %c0_8 = arith.constant 0 : index
    %8 = vector.load %arg5[%c0_7, %c0_8] : memref<1x128xf32, #tpu.memory_space<vmem>>, vector<1x128xf32>
    %cst_9 = arith.constant dense<0.000000e+00> : vector<8xf32>
    %9 = vector.multi_reduction <add>, %6, %cst_9 [1] : vector<8x128xf32> to vector<8xf32>
    %10 = vector.shape_cast %9 : vector<8xf32> to vector<8x1xf32>
    %cst_10 = arith.constant 3.125000e-02 : f32
    %11 = vector.broadcast %cst_10 : f32 to vector<8x1xf32>
    %12 = arith.mulf %10, %11 : vector<8x1xf32>
    %13 = arith.mulf %6, %6 : vector<8x128xf32>
    %cst_11 = arith.constant dense<0.000000e+00> : vector<8xf32>
    %14 = vector.multi_reduction <add>, %13, %cst_11 [1] : vector<8x128xf32> to vector<8xf32>
    %15 = vector.shape_cast %14 : vector<8xf32> to vector<8x1xf32>
    %cst_12 = arith.constant 3.125000e-02 : f32
    %16 = vector.broadcast %cst_12 : f32 to vector<8x1xf32>
    %17 = arith.mulf %15, %16 : vector<8x1xf32>
    %18 = arith.mulf %12, %12 : vector<8x1xf32>
    %19 = arith.subf %17, %18 : vector<8x1xf32>
    %cst_13 = arith.constant 0.000000e+00 : f32
    %20 = vector.broadcast %cst_13 : f32 to vector<8x1xf32>
    %21 = arith.maximumf %19, %20 : vector<8x1xf32>
    %22 = vector.broadcast %12 : vector<8x1xf32> to vector<8x128xf32>
    %23 = arith.subf %6, %22 : vector<8x128xf32>
    %cst_14 = arith.constant 9.99999974E-6 : f32
    %24 = vector.broadcast %cst_14 : f32 to vector<8x1xf32>
    %25 = arith.addf %21, %24 : vector<8x1xf32>
    %26 = math.rsqrt %25 : vector<8x1xf32>
    %27 = vector.broadcast %26 : vector<8x1xf32> to vector<8x128xf32>
    %28 = arith.mulf %23, %27 : vector<8x128xf32>
    %29 = vector.broadcast %7 : vector<1x128xf32> to vector<8x128xf32>
    %30 = arith.mulf %28, %29 : vector<8x128xf32>
    %31 = vector.broadcast %8 : vector<1x128xf32> to vector<8x128xf32>
    %32 = arith.addf %30, %31 : vector<8x128xf32>
    %33 = arith.addf %0, %32 : vector<8x128xf32>
    %c0_15 = arith.constant 0 : index
    %c0_16 = arith.constant 0 : index
    %34 = vector.load %arg6[%c0_15, %c0_16] : memref<8x128xf32, #tpu.memory_space<vmem>>, vector<8x128xf32>
    tpu.vector_store %arg6[%c0_15, %c0_16], %33 {strides = array<i32>} : memref<8x128xf32, #tpu.memory_space<vmem>>, vector<8x128xf32>,
    return
  }
  func.func @transform_0(%arg0: i32) -> (i32, i32) {
    %c0_i32 = arith.constant 0 : i32
    %c0_i32_0 = arith.constant 0 : i32
    return %arg0, %c0_i32 : i32, i32
  }
  func.func @transform_1(%arg0: i32) -> (i32, i32) {
    %c0_i32 = arith.constant 0 : i32
    %c0_i32_0 = arith.constant 0 : i32
    %c0_i32_1 = arith.constant 0 : i32
    return %c0_i32, %c0_i32_0 : i32, i32
  }
  func.func @transform_2(%arg0: i32) -> (i32, i32) {
    %c0_i32 = arith.constant 0 : i32
    %c0_i32_0 = arith.constant 0 : i32
    %c0_i32_1 = arith.constant 0 : i32
    return %c0_i32, %c0_i32_0 : i32, i32
  }
  func.func @transform_3(%arg0: i32) -> (i32, i32) {
    %c0_i32 = arith.constant 0 : i32
    %c0_i32_0 = arith.constant 0 : i32
    %c0_i32_1 = arith.constant 0 : i32
    return %c0_i32, %c0_i32_0 : i32, i32
  }
  func.func @transform_4(%arg0: i32) -> (i32, i32) {
    %c0_i32 = arith.constant 0 : i32
    %c0_i32_0 = arith.constant 0 : i32
    %c0_i32_1 = arith.constant 0 : i32
    return %c0_i32, %c0_i32_0 : i32, i32
  }
  func.func @transform_5(%arg0: i32) -> (i32, i32) {
    %c0_i32 = arith.constant 0 : i32
    %c0_i32_0 = arith.constant 0 : i32
    return %arg0, %c0_i32 : i32, i32
  }
}

</mosaic_0001>

<llo_original>
// kernel: _residual_impl.1
$region0: #{_residual_impl.1}
  #allocation0 [shape = 'u32[]', space=smem, size = 0x4, offset = 0x4, fixed_abs, tag = 'smem constant byte address 0x4 - core index']
  #allocation1 [shape = 'u32[144,128]{1,0:T(1,128)}', space=vmem, size = 0x12000, scoped, tag = 'internal scratch']
  %s0 = inlined_call_operand.vmem [shape: f32[16,128], index: 0, kind: input, shape index: {}, may-alias: {0,5}]
  %s1 = inlined_call_operand.vmem [shape: bf16[128,128], index: 1, kind: input, shape index: {}]
  %s2 = inlined_call_operand.vmem [shape: f32[1,128], index: 2, kind: input, shape index: {}]
  %s3 = inlined_call_operand.vmem [shape: f32[1,128], index: 3, kind: input, shape index: {}]
  %s4 = inlined_call_operand.vmem [shape: f32[1,128], index: 4, kind: input, shape index: {}]
  %s5 = inlined_call_operand.vmem [shape: f32[16,128], index: 5, kind: output, shape index: {}, may-alias: {0,5}]
  %s6 = sld [smem:[#allocation0]]
  $region53: #{_residual_impl.1} parent=0
    _
  %s8 = ssub.s32 1, %s6
  %s9 = scalar_select 0, %s8, %s6
  loop: start=0, step=1, limit=4
  $region2: #{_residual_impl.1} parent=0 // loop_pre_header
    _
  $region3: #{_residual_impl.1} parent=0 // loop_header
    %s11 = sphi 0, %s15
    %p12 = scmp.ge.s32.totalorder %s11, 4
    %s21 = sphi 0, %s23
    %s24 = sphi 0, %s21
    %s25 = sphi 0, %s24
    %s41 = sphi 0, %s25
    %s45 = sphi 0, %s45
    %s47 = sphi 0, %s45
    %s48 = sphi 0, %s47
    %s62 = sphi 0, %s48
    %s66 = sphi 0, %s66
    %s68 = sphi 0, %s66
    %s69 = sphi 0, %s68
    %s83 = sphi 0, %s69
    %s87 = sphi 0, %s87
    %s89 = sphi 0, %s87
    %s90 = sphi 0, %s89
    %s104 = sphi 0, %s90
    %s108 = sphi 0, %s108
    %s110 = sphi 0, %s108
    %s111 = sphi 0, %s110
    %s125 = sphi 0, %s111
    %s131 = sphi 0, %s133
    %s134 = sphi 0, %s131
    %s135 = sphi 0, %s134
    %s151 = sphi 0, %s135
  $region4: #{_residual_impl.1} parent=0 // loop_header_branch
    %14 = sbr.rel (%p12) target = $region8
  $region5: #{_residual_impl.1} parent=0 // loop_body
    %s16 = ssub.s32 %s11, 1
    %s17 = ssub.s32 %s11, 2
    %s18 = sadd.s32 %s11, 1
    %s19 = ssub.s32 %s11, %s18
    %p20 = scmp.eq.s32.totalorder %s19, 0
    %s22 = sadd.s32 %s21, 1
    %s23 = scalar_select %p20, %s21, %s22
    %p26 = pneg %p20
    %p27 = scmp.eq.s32.totalorder %s11, 1
    %p28 = por %p26, %p27
    %p29 = scmp.ne.s32.totalorder %s21, %s24
    %p30 = scmp.eq.s32.totalorder %s11, 0
    %p31 = por %p29, %p30
    %p32 = scmp.ne.s32.totalorder %s21, %s24
    %p33 = scmp.eq.s32.totalorder %s16, 1
    %p34 = por %p32, %p33
    %p35 = scmp.ne.s32.totalorder %s24, %s25
    %p36 = scmp.eq.s32.totalorder %s16, 0
    %p37 = por %p35, %p36
    %p38 = scmp.ne.s32.totalorder %s24, %s25
    %p39 = scmp.eq.s32.totalorder %s17, 1
    %p40 = por %p38, %p39
    %p42 = scmp.ne.s32.totalorder %s25, %s41
    %p43 = scmp.eq.s32.totalorder %s17, 0
    %p44 = por %p42, %p43
    %s46 = sadd.s32 %s45, 1
    %p49 = scmp.eq.s32.totalorder %s11, 1
    %p50 = scmp.ne.s32.totalorder %s45, %s47
    %p51 = scmp.eq.s32.totalorder %s11, 0
    %p52 = por %p50, %p51
    %p53 = scmp.ne.s32.totalorder %s45, %s47
    %p54 = scmp.eq.s32.totalorder %s16, 1
    %p55 = por %p53, %p54
    %p56 = scmp.ne.s32.totalorder %s47, %s48
    %p57 = scmp.eq.s32.totalorder %s16, 0
    %p58 = por %p56, %p57
    %p59 = scmp.ne.s32.totalorder %s47, %s48
    %p60 = scmp.eq.s32.totalorder %s17, 1
    %p61 = por %p59, %p60
    %p63 = scmp.ne.s32.totalorder %s48, %s62
    %p64 = scmp.eq.s32.totalorder %s17, 0
    %p65 = por %p63, %p64
    %s67 = sadd.s32 %s66, 1
    %p70 = scmp.eq.s32.totalorder %s11, 1
    %p71 = scmp.ne.s32.totalorder %s66, %s68
    %p72 = scmp.eq.s32.totalorder %s11, 0
    %p73 = por %p71, %p72
    %p74 = scmp.ne.s32.totalorder %s66, %s68
    %p75 = scmp.eq.s32.totalorder %s16, 1
    %p76 = por %p74, %p75
    %p77 = scmp.ne.s32.totalorder %s68, %s69
    %p78 = scmp.eq.s32.totalorder %s16, 0
    %p79 = por %p77, %p78
    %p80 = scmp.ne.s32.totalorder %s68, %s69
    %p81 = scmp.eq.s32.totalorder %s17, 1
    %p82 = por %p80, %p81
    %p84 = scmp.ne.s32.totalorder %s69, %s83
    %p85 = scmp.eq.s32.totalorder %s17, 0
    %p86 = por %p84, %p85
    %s88 = sadd.s32 %s87, 1
    %p91 = scmp.eq.s32.totalorder %s11, 1
    %p92 = scmp.ne.s32.totalorder %s87, %s89
    %p93 = scmp.eq.s32.totalorder %s11, 0
    %p94 = por %p92, %p93
    %p95 = scmp.ne.s32.totalorder %s87, %s89
    %p96 = scmp.eq.s32.totalorder %s16, 1
    %p97 = por %p95, %p96
    %p98 = scmp.ne.s32.totalorder %s89, %s90
    %p99 = scmp.eq.s32.totalorder %s16, 0
    %p100 = por %p98, %p99
    %p101 = scmp.ne.s32.totalorder %s89, %s90
    %p102 = scmp.eq.s32.totalorder %s17, 1
    %p103 = por %p101, %p102
    %p105 = scmp.ne.s32.totalorder %s90, %s104
    %p106 = scmp.eq.s32.totalorder %s17, 0
    %p107 = por %p105, %p106
    %s109 = sadd.s32 %s108, 1
    %p112 = scmp.eq.s32.totalorder %s11, 1
    %p113 = scmp.ne.s32.totalorder %s108, %s110
    %p114 = scmp.eq.s32.totalorder %s11, 0
    %p115 = por %p113, %p114
    %p116 = scmp.ne.s32.totalorder %s108, %s110
    %p117 = scmp.eq.s32.totalorder %s16, 1
    %p118 = por %p116, %p117
    %p119 = scmp.ne.s32.totalorder %s110, %s111
    %p120 = scmp.eq.s32.totalorder %s16, 0
    %p121 = por %p119, %p120
    %p122 = scmp.ne.s32.totalorder %s110, %s111
    %p123 = scmp.eq.s32.totalorder %s17, 1
    %p124 = por %p122, %p123
    %p126 = scmp.ne.s32.totalorder %s111, %s125
    %p127 = scmp.eq.s32.totalorder %s17, 0
    %p128 = por %p126, %p127
    %s129 = ssub.s32 %s11, %s18
    %p130 = scmp.eq.s32.totalorder %s129, 0
    %s132 = sadd.s32 %s131, 1
    %s133 = scalar_select %p130, %s131, %s132
    %p136 = pneg %p130
    %p137 = scmp.eq.s32.totalorder %s11, 1
    %p138 = por %p136, %p137
    %p139 = scmp.ne.s32.totalorder %s131, %s134
    %p140 = scmp.eq.s32.totalorder %s11, 0
    %p141 = por %p139, %p140
    %p142 = scmp.ne.s32.totalorder %s131, %s134
    %p143 = scmp.eq.s32.totalorder %s16, 1
    %p144 = por %p142, %p143
    %p145 = scmp.ne.s32.totalorder %s134, %s135
    %p146 = scmp.eq.s32.totalorder %s16, 0
    %p147 = por %p145, %p146
    %p148 = scmp.ne.s32.totalorder %s134, %s135
    %p149 = scmp.eq.s32.totalorder %s17, 1
    %p150 = por %p148, %p149
    %p152 = scmp.ne.s32.totalorder %s135, %s151
    %p153 = scmp.eq.s32.totalorder %s17, 0
    %p154 = por %p152, %p153
    %p155 = scmp.le.s32.totalorder 1, %s11
    %p156 = scmp.lt.s32.totalorder %s11, 3
    %p157 = pnand %p155, %p156
    %p158 = pneg %p157
    // Predicated region
    $region9: #{_residual_impl.1} parent=5 // pred_check
      _
    $region10: #{_residual_impl.1} parent=5 // pred_check_branch
      %160 = sbr.rel (%p157) target = $region12
    $region11: #{_residual_impl.1} parent=5 // pred_region
      %s161 = ssub.s32 %s11, 1
      // Predicated region
      $region13: #{_residual_impl.1} parent=11 // pred_check
        %p162 = pneg %p58
      $region14: #{_residual_impl.1} parent=11 // pred_check_branch
        %164 = sbr.rel (%p162) target = $region16
      $region15: #{_residual_impl.1} parent=11 // pred_region
        _
      $region16: #{_residual_impl.1} parent=11 // pred_fallthru
        _
      // Predicated region
      $region17: #{_residual_impl.1} parent=11 // pred_check
        %p165 = pneg %p79
      $region18: #{_residual_impl.1} parent=11 // pred_check_branch
        %167 = sbr.rel (%p165) target = $region20
      $region19: #{_residual_impl.1} parent=11 // pred_region
        _
      $region20: #{_residual_impl.1} parent=11 // pred_fallthru
        _
      // Predicated region
      $region21: #{_residual_impl.1} parent=11 // pred_check
        %p168 = pneg %p100
      $region22: #{_residual_impl.1} parent=11 // pred_check_branch
        %170 = sbr.rel (%p168) target = $region24
      $region23: #{_residual_impl.1} parent=11 // pred_region
        _
      $region24: #{_residual_impl.1} parent=11 // pred_fallthru
        _
      // Predicated region
      $region25: #{_residual_impl.1} parent=11 // pred_check
        %p171 = pneg %p121
      $region26: #{_residual_impl.1} parent=11 // pred_check_branch
        %173 = sbr.rel (%p171) target = $region28
      $region27: #{_residual_impl.1} parent=11 // pred_region
        _
      $region28: #{_residual_impl.1} parent=11 // pred_fallthru
        _
    $region12: #{_residual_impl.1} parent=5 // pred_fallthru
      _
    %p174 = scmp.lt.s32.totalorder %s11, 2
    // Predicated region
    $region29: #{_residual_impl.1} parent=5 // pred_check
      %p175 = pneg %p174
    $region30: #{_residual_impl.1} parent=5 // pred_check_branch
      %177 = sbr.rel (%p175) target = $region32
    $region31: #{_residual_impl.1} parent=5 // pred_region
      // Predicated region
      $region33: #{_residual_impl.1} parent=31 // pred_check
        %p178 = pneg %p31
      $region34: #{_residual_impl.1} parent=31 // pred_check_branch
        %180 = sbr.rel (%p178) target = $region36
      $region35: #{_residual_impl.1} parent=31 // pred_region
        %p181 = scmp.lt.s32.totalorder %s11, 1
        %s182 = scalar_select %p181, %s11, 1
        %s183 = smul.addr %s182, 8
        %s184 = scalar_lea.vmem %s0, %s183
      $region36: #{_residual_impl.1} parent=31 // pred_fallthru
        _
    $region32: #{_residual_impl.1} parent=5 // pred_fallthru
      _
    %p185 = scmp.le.s32.totalorder 1, %s11
    %p186 = scmp.lt.s32.totalorder %s11, 3
    %p187 = pnand %p185, %p186
    %p188 = pneg %p187
    // Predicated region
    $region37: #{_residual_impl.1} parent=5 // pred_check
      _
    $region38: #{_residual_impl.1} parent=5 // pred_check_branch
      %190 = sbr.rel (%p187) target = $region40
    $region39: #{_residual_impl.1} parent=5 // pred_region
      %s191 = ssub.s32 %s11, 1
      %p192 = scmp.lt.s32.totalorder %s16, 1
      %s193 = scalar_select %p192, %s16, 1
      %s194 = smul.addr %s193, 8
      %s195 = scalar_lea.vmem %s0, %s194
      %p196 = pneg %p37
      %p197 = pneg %p34
      %p198 = pneg %p58
      %p199 = pneg %p55
      %p200 = pneg %p79
      %p201 = pneg %p76
      %p202 = pneg %p100
      %p203 = pneg %p97
      %p204 = pneg %p121
      %p205 = pneg %p118
      %p206 = pneg %p147
      %p207 = pneg %p144
      %p208 = scmp.lt.s32.totalorder %s16, 1
      %s209 = scalar_select %p208, %s16, 1
      %s210 = smul.addr %s209, 8
      %s211 = scalar_lea.vmem %s5, %s210
      %p212 = scmp.lt.s32.totalorder %s16, 1
      %s213 = scalar_select %p212, %s16, 1
      %s214 = smul.addr %s213, 8
      %s215 = scalar_lea.vmem %s0, %s214
      %p216 = scmp.lt.s32.totalorder %s16, 1
      %s217 = scalar_select %p216, %s16, 1
      %s218 = smul.addr %s217, 8
      %s219 = scalar_lea.vmem %s5, %s218
      %v221 = vld [vmem:[%s215] sm:$0xff]
      %v222 = vpack.c.bf16 %v221, %v221
      %v223 = vld [vmem:[%s1] sm:$0xf]
      %v224 = vld [vmem:[%s1 + $0x4] sm:$0xf]
      %v225 = vld [vmem:[%s1 + $0x8] sm:$0xf]
      %v226 = vld [vmem:[%s1 + $0xc] sm:$0xf]
      %v227 = vld [vmem:[%s1 + $0x10] sm:$0xf]
      %v228 = vld [vmem:[%s1 + $0x14] sm:$0xf]
      %v229 = vld [vmem:[%s1 + $0x18] sm:$0xf]
      %v230 = vld [vmem:[%s1 + $0x1c] sm:$0xf]
      %v231 = vld [vmem:[%s1 + $0x20] sm:$0xf]
      %v232 = vld [vmem:[%s1 + $0x24] sm:$0xf]
      %v233 = vld [vmem:[%s1 + $0x28] sm:$0xf]
      %v234 = vld [vmem:[%s1 + $0x2c] sm:$0xf]
      %v235 = vld [vmem:[%s1 + $0x30] sm:$0xf]
      %v236 = vld [vmem:[%s1 + $0x34] sm:$0xf]
      %v237 = vld [vmem:[%s1 + $0x38] sm:$0xf]
      %v238 = vld [vmem:[%s1 + $0x3c] sm:$0xf]
      %v239 = vld [vmem:[%s2] sm:$0x1]
      %v241 = vlaneseq
      %v242 = vshrl.u32 %v241, 7
      %v243 = vsub.s32 0, %v242
      %v244 = vrot.slane %v239, %v243
      %v262 = vunpack.c.l.b16 %v223
      %v263 = vunpack.c.l.b16 %v224
      %v264 = vunpack.c.l.b16 %v225
      %v265 = vunpack.c.l.b16 %v226
      %v266 = vunpack.c.l.b16 %v227
      %v267 = vunpack.c.l.b16 %v228
      %v268 = vunpack.c.l.b16 %v229
      %v269 = vunpack.c.l.b16 %v230
      %v270 = vunpack.c.l.b16 %v231
      %v271 = vunpack.c.l.b16 %v232
      %v272 = vunpack.c.l.b16 %v233
      %v273 = vunpack.c.l.b16 %v234
      %v274 = vunpack.c.l.b16 %v235
      %v275 = vunpack.c.l.b16 %v236
      %v276 = vunpack.c.l.b16 %v237
      %v277 = vunpack.c.l.b16 %v238
      %v278 = vpack.c.b16 %v263, %v262
      %v279 = vpack.c.b16 %v265, %v264
      %v280 = vpack.c.b16 %v267, %v266
      %v281 = vpack.c.b16 %v269, %v268
      %v282 = vpack.c.b16 %v271, %v270
      %v283 = vpack.c.b16 %v273, %v272
      %v284 = vpack.c.b16 %v275, %v274
      %v285 = vpack.c.b16 %v277, %v276
      %294 = vmatprep.subr.bf16.mxu0 0
      %295 = vmatpush1.bf16.msra.mxu0 %v278
      %296 = vmatprep.subr.bf16.mxu0 0
      %297 = vmatpush1.bf16.msra.mxu0 %v279
      %298 = vmatprep.subr.bf16.mxu0 0
      %299 = vmatpush1.bf16.msra.mxu0 %v280
      %300 = vmatprep.subr.bf16.mxu0 0
      %301 = vmatpush1.bf16.msra.mxu0 %v281
      %302 = vmatprep.subr.bf16.mxu0 0
      %303 = vmatpush1.bf16.msra.mxu0 %v282
      %304 = vmatprep.subr.bf16.mxu0 0
      %305 = vmatpush1.bf16.msra.mxu0 %v283
      %306 = vmatprep.subr.bf16.mxu0 0
      %307 = vmatpush1.bf16.msra.mxu0 %v284
      %308 = vmatprep.subr.bf16.mxu0 0
      %309 = vmatpush1.bf16.msra.mxu0 %v285
      %310 = vmatprep.subr.bf16.mxu0 0
      %311 = vmatpush1.bf16.msra.mxu0 0
      %312 = vmatprep.subr.bf16.mxu0 0
      %313 = vmatpush1.bf16.msra.mxu0 0
      %314 = vmatprep.subr.bf16.mxu0 0
      %315 = vmatpush1.bf16.msra.mxu0 0
      %316 = vmatprep.subr.bf16.mxu0 0
      %317 = vmatpush1.bf16.msra.mxu0 0
      %318 = vmatprep.subr.bf16.mxu0 0
      %319 = vmatpush1.bf16.msra.mxu0 0
      %320 = vmatprep.subr.bf16.mxu0 0
      %321 = vmatpush1.bf16.msra.mxu0 0
      %322 = vmatprep.subr.bf16.mxu0 0
      %323 = vmatpush1.bf16.msra.mxu0 0
      %324 = vmatprep.subr.bf16.mxu0 0
      %325 = vmatpush1.bf16.msra.mxu0 0
      %326 = vmatprep.mubr.bf16.mxu0 0
      %327 = vmatmul.mubr.bf16.gmra.mrb[0].mxu0 %v222
      %v328 = vpop.f32.mrb[0].mxu0
      %v329 = vadd.f32 %v244, %v328
      %v330 = vpop.f32.mrb[0].mxu0
      %v331 = vpop.f32.mrb[0].mxu0
      %v332 = vpop.f32.mrb[0].mxu0
      %333 = vdwg.mxu0
      %v334 = vld [vmem:[%s3] sm:$0x1]
      %v335 = vld [vmem:[%s4] sm:$0x1]
      %336 = vadd.xlane.f32.xlu0 %v329
      %v337 = vpop.xlane.xlu0 %336
      %v338 = vmul.f32 %v337, 0.03125
      %v339 = vmul.f32 %v329, %v329
      %340 = vadd.xlane.f32.xlu0 %v339
      %v341 = vpop.xlane.xlu0 %340
      %v342 = vmul.f32 %v341, 0.03125
      %v343 = vmul.f32 %v338, %v338
      %v344 = vsub.f32 %v342, %v343
      %v345 = vmax.f32 %v344, 0.0
      %v346 = vsub.f32 %v329, %v338
      %v347 = vadd.f32 %v345, 1e-05
      %v348 = vrsqrt.pop %v347
      %v349 = vmul.f32 %v346, %v348
      %v351 = vlaneseq
      %v352 = vshrl.u32 %v351, 7
      %v353 = vsub.s32 0, %v352
      %v354 = vrot.slane %v334, %v353
      %v356 = vmul.f32 %v349, %v354
      %v358 = vlaneseq
      %v359 = vshrl.u32 %v358, 7
      %v360 = vsub.s32 0, %v359
      %v361 = vrot.slane %v335, %v360
      %v363 = vadd.f32 %v356, %v361
      %v364 = vadd.f32 %v221, %v363
      %365 = vst [vmem:[%s219] sm:$0xff] %v364
      %p366 = scmp.lt.s32.totalorder %s16, 1
      %s367 = scalar_select %p366, %s16, 1
      %s368 = smul.addr %s367, 8
      %s369 = scalar_lea.vmem %s5, %s368
      // Predicated region
      $region41: #{_residual_impl.1} parent=39 // pred_check
        %p370 = pneg %p144
      $region42: #{_residual_impl.1} parent=39 // pred_check_branch
        %372 = sbr.rel (%p370) target = $region44
      $region43: #{_residual_impl.1} parent=39 // pred_region
        _
      $region44: #{_residual_impl.1} parent=39 // pred_fallthru
        _
    $region40: #{_residual_impl.1} parent=5 // pred_fallthru
      _
    %p373 = scmp.le.s32.totalorder 2, %s11
    // Predicated region
    $region45: #{_residual_impl.1} parent=5 // pred_check
      %p374 = pneg %p373
    $region46: #{_residual_impl.1} parent=5 // pred_check_branch
      %376 = sbr.rel (%p374) target = $region48
    $region47: #{_residual_impl.1} parent=5 // pred_region
      %s377 = ssub.s32 %s11, 2
      // Predicated region
      $region49: #{_residual_impl.1} parent=47 // pred_check
        %p378 = pneg %p150
      $region50: #{_residual_impl.1} parent=47 // pred_check_branch
        %380 = sbr.rel (%p378) target = $region52
      $region51: #{_residual_impl.1} parent=47 // pred_region
        %p381 = scmp.lt.s32.totalorder %s17, 1
        %s382 = scalar_select %p381, %s17, 1
        %s383 = smul.addr %s382, 8
        %s384 = scalar_lea.vmem %s5, %s383
      $region52: #{_residual_impl.1} parent=47 // pred_fallthru
        _
    $region48: #{_residual_impl.1} parent=5 // pred_fallthru
      _
  $region6: #{_residual_impl.1} parent=0 // loop_footer
    %s15 = sadd.s32 1, %s11
  $region7: #{_residual_impl.1} parent=0 // loop_footer_branch
    %10 = sbr.rel target = $region3
  $region8: #{_residual_impl.1} parent=0 // loop_exit
    _

// kernel: _residual_impl.1
$region0: #{_residual_impl.1}
  #allocation0 [shape = 'u32[]', space=smem, size = 0x4, offset = 0x4, fixed_abs, tag = 'smem constant byte address 0x4 - core index']
  #allocation1 [shape = 'u32[144,128]{1,0:T(1,128)}', space=vmem, size = 0x12000, scoped, tag = 'internal scratch']
  %s0 = inlined_call_operand.vmem [shape: f32[16,128], index: 0, kind: input, shape index: {}, may-alias: {0,5}]
  %s1 = inlined_call_operand.vmem [shape: bf16[128,128], index: 1, kind: input, shape index: {}]
  %s2 = inlined_call_operand.vmem [shape: f32[1,128], index: 2, kind: input, shape index: {}]
  %s3 = inlined_call_operand.vmem [shape: f32[1,128], index: 3, kind: input, shape index: {}]
  %s4 = inlined_call_operand.vmem [shape: f32[1,128], index: 4, kind: input, shape index: {}]
  %s5 = inlined_call_operand.vmem [shape: f32[16,128], index: 5, kind: output, shape index: {}, may-alias: {0,5}]
  %s6 = sld [smem:[#allocation0]]
  $region53: #{_residual_impl.1} parent=0
    _
  %s8 = ssub.s32 1, %s6
  %s9 = scalar_select 0, %s8, %s6
  loop: start=0, step=1, limit=4
  $region2: #{_residual_impl.1} parent=0 // loop_pre_header
    _
  $region3: #{_residual_impl.1} parent=0 // loop_header
    %s11 = sphi 0, %s15
    %p12 = scmp.ge.s32.totalorder %s11, 4
    %s21 = sphi 0, %s23
    %s24 = sphi 0, %s21
    %s25 = sphi 0, %s24
    %s41 = sphi 0, %s25
    %s45 = sphi 0, %s45
    %s47 = sphi 0, %s45
    %s48 = sphi 0, %s47
    %s62 = sphi 0, %s48
    %s66 = sphi 0, %s66
    %s68 = sphi 0, %s66
    %s69 = sphi 0, %s68
    %s83 = sphi 0, %s69
    %s87 = sphi 0, %s87
    %s89 = sphi 0, %s87
    %s90 = sphi 0, %s89
    %s104 = sphi 0, %s90
    %s108 = sphi 0, %s108
    %s110 = sphi 0, %s108
    %s111 = sphi 0, %s110
    %s125 = sphi 0, %s111
    %s131 = sphi 0, %s133
    %s134 = sphi 0, %s131
    %s135 = sphi 0, %s134
    %s151 = sphi 0, %s135
  $region4: #{_residual_impl.1} parent=0 // loop_header_branch
    %14 = sbr.rel (%p12) target = $region8
  $region5: #{_residual_impl.1} parent=0 // loop_body
    %s16 = ssub.s32 %s11, 1
    %s17 = ssub.s32 %s11, 2
    %s18 = sadd.s32 %s11, 1
    %s19 = ssub.s32 %s11, %s18
    %p20 = scmp.eq.s32.totalorder %s19, 0
    %s22 = sadd.s32 %s21, 1
    %s23 = scalar_select %p20, %s21, %s22
    %p26 = pneg %p20
    %p27 = scmp.eq.s32.totalorder %s11, 1
    %p28 = por %p26, %p27
    %p29 = scmp.ne.s32.totalorder %s21, %s24
    %p30 = scmp.eq.s32.totalorder %s11, 0
    %p31 = por %p29, %p30
    %p32 = scmp.ne.s32.totalorder %s21, %s24
    %p33 = scmp.eq.s32.totalorder %s16, 1
    %p34 = por %p32, %p33
    %p35 = scmp.ne.s32.totalorder %s24, %s25
    %p36 = scmp.eq.s32.totalorder %s16, 0
    %p37 = por %p35, %p36
    %p38 = scmp.ne.s32.totalorder %s24, %s25
    %p39 = scmp.eq.s32.totalorder %s17, 1
    %p40 = por %p38, %p39
    %p42 = scmp.ne.s32.totalorder %s25, %s41
    %p43 = scmp.eq.s32.totalorder %s17, 0
    %p44 = por %p42, %p43
    %s46 = sadd.s32 %s45, 1
    %p49 = scmp.eq.s32.totalorder %s11, 1
    %p50 = scmp.ne.s32.totalorder %s45, %s47
    %p51 = scmp.eq.s32.totalorder %s11, 0
    %p52 = por %p50, %p51
    %p53 = scmp.ne.s32.totalorder %s45, %s47
    %p54 = scmp.eq.s32.totalorder %s16, 1
    %p55 = por %p53, %p54
    %p56 = scmp.ne.s32.totalorder %s47, %s48
    %p57 = scmp.eq.s32.totalorder %s16, 0
    %p58 = por %p56, %p57
    %p59 = scmp.ne.s32.totalorder %s47, %s48
    %p60 = scmp.eq.s32.totalorder %s17, 1
    %p61 = por %p59, %p60
    %p63 = scmp.ne.s32.totalorder %s48, %s62
    %p64 = scmp.eq.s32.totalorder %s17, 0
    %p65 = por %p63, %p64
    %s67 = sadd.s32 %s66, 1
    %p70 = scmp.eq.s32.totalorder %s11, 1
    %p71 = scmp.ne.s32.totalorder %s66, %s68
    %p72 = scmp.eq.s32.totalorder %s11, 0
    %p73 = por %p71, %p72
    %p74 = scmp.ne.s32.totalorder %s66, %s68
    %p75 = scmp.eq.s32.totalorder %s16, 1
    %p76 = por %p74, %p75
    %p77 = scmp.ne.s32.totalorder %s68, %s69
    %p78 = scmp.eq.s32.totalorder %s16, 0
    %p79 = por %p77, %p78
    %p80 = scmp.ne.s32.totalorder %s68, %s69
    %p81 = scmp.eq.s32.totalorder %s17, 1
    %p82 = por %p80, %p81
    %p84 = scmp.ne.s32.totalorder %s69, %s83
    %p85 = scmp.eq.s32.totalorder %s17, 0
    %p86 = por %p84, %p85
    %s88 = sadd.s32 %s87, 1
    %p91 = scmp.eq.s32.totalorder %s11, 1
    %p92 = scmp.ne.s32.totalorder %s87, %s89
    %p93 = scmp.eq.s32.totalorder %s11, 0
    %p94 = por %p92, %p93
    %p95 = scmp.ne.s32.totalorder %s87, %s89
    %p96 = scmp.eq.s32.totalorder %s16, 1
    %p97 = por %p95, %p96
    %p98 = scmp.ne.s32.totalorder %s89, %s90
    %p99 = scmp.eq.s32.totalorder %s16, 0
    %p100 = por %p98, %p99
    %p101 = scmp.ne.s32.totalorder %s89, %s90
    %p102 = scmp.eq.s32.totalorder %s17, 1
    %p103 = por %p101, %p102
    %p105 = scmp.ne.s32.totalorder %s90, %s104
    %p106 = scmp.eq.s32.totalorder %s17, 0
    %p107 = por %p105, %p106
    %s109 = sadd.s32 %s108, 1
    %p112 = scmp.eq.s32.totalorder %s11, 1
    %p113 = scmp.ne.s32.totalorder %s108, %s110
    %p114 = scmp.eq.s32.totalorder %s11, 0
    %p115 = por %p113, %p114
    %p116 = scmp.ne.s32.totalorder %s108, %s110
    %p117 = scmp.eq.s32.totalorder %s16, 1
    %p118 = por %p116, %p117
    %p119 = scmp.ne.s32.totalorder %s110, %s111
    %p120 = scmp.eq.s32.totalorder %s16, 0
    %p121 = por %p119, %p120
    %p122 = scmp.ne.s32.totalorder %s110, %s111
    %p123 = scmp.eq.s32.totalorder %s17, 1
    %p124 = por %p122, %p123
    %p126 = scmp.ne.s32.totalorder %s111, %s125
    %p127 = scmp.eq.s32.totalorder %s17, 0
    %p128 = por %p126, %p127
    %s129 = ssub.s32 %s11, %s18
    %p130 = scmp.eq.s32.totalorder %s129, 0
    %s132 = sadd.s32 %s131, 1
    %s133 = scalar_select %p130, %s131, %s132
    %p136 = pneg %p130
    %p137 = scmp.eq.s32.totalorder %s11, 1
    %p138 = por %p136, %p137
    %p139 = scmp.ne.s32.totalorder %s131, %s134
    %p140 = scmp.eq.s32.totalorder %s11, 0
    %p141 = por %p139, %p140
    %p142 = scmp.ne.s32.totalorder %s131, %s134
    %p143 = scmp.eq.s32.totalorder %s16, 1
    %p144 = por %p142, %p143
    %p145 = scmp.ne.s32.totalorder %s134, %s135
    %p146 = scmp.eq.s32.totalorder %s16, 0
    %p147 = por %p145, %p146
    %p148 = scmp.ne.s32.totalorder %s134, %s135
    %p149 = scmp.eq.s32.totalorder %s17, 1
    %p150 = por %p148, %p149
    %p152 = scmp.ne.s32.totalorder %s135, %s151
    %p153 = scmp.eq.s32.totalorder %s17, 0
    %p154 = por %p152, %p153
    %p155 = scmp.le.s32.totalorder 1, %s11
    %p156 = scmp.lt.s32.totalorder %s11, 3
    %p157 = pnand %p155, %p156
    %p158 = pneg %p157
    // Predicated region
    $region9: #{_residual_impl.1} parent=5 // pred_check
      _
    $region10: #{_residual_impl.1} parent=5 // pred_check_branch
      %160 = sbr.rel (%p157) target = $region12
    $region11: #{_residual_impl.1} parent=5 // pred_region
      %s161 = ssub.s32 %s11, 1
      // Predicated region
      $region13: #{_residual_impl.1} parent=11 // pred_check
        %p162 = pneg %p58
      $region14: #{_residual_impl.1} parent=11 // pred_check_branch
        %164 = sbr.rel (%p162) target = $region16
      $region15: #{_residual_impl.1} parent=11 // pred_region
        _
      $region16: #{_residual_impl.1} parent=11 // pred_fallthru
        _
      // Predicated region
      $region17: #{_residual_impl.1} parent=11 // pred_check
        %p165 = pneg %p79
      $region18: #{_residual_impl.1} parent=11 // pred_check_branch
        %167 = sbr.rel (%p165) target = $region20
      $region19: #{_residual_impl.1} parent=11 // pred_region
        _
      $region20: #{_residual_impl.1} parent=11 // pred_fallthru
        _
      // Predicated region
      $region21: #{_residual_impl.1} parent=11 // pred_check
        %p168 = pneg %p100
      $region22: #{_residual_impl.1} parent=11 // pred_check_branch
        %170 = sbr.rel (%p168) target = $region24
      $region23: #{_residual_impl.1} parent=11 // pred_region
        _
      $region24: #{_residual_impl.1} parent=11 // pred_fallthru
        _
      // Predicated region
      $region25: #{_residual_impl.1} parent=11 // pred_check
        %p171 = pneg %p121
      $region26: #{_residual_impl.1} parent=11 // pred_check_branch
        %173 = sbr.rel (%p171) target = $region28
      $region27: #{_residual_impl.1} parent=11 // pred_region
        _
      $region28: #{_residual_impl.1} parent=11 // pred_fallthru
        _
    $region12: #{_residual_impl.1} parent=5 // pred_fallthru
      _
    %p174 = scmp.lt.s32.totalorder %s11, 2
    // Predicated region
    $region29: #{_residual_impl.1} parent=5 // pred_check
      %p175 = pneg %p174
    $region30: #{_residual_impl.1} parent=5 // pred_check_branch
      %177 = sbr.rel (%p175) target = $region32
    $region31: #{_residual_impl.1} parent=5 // pred_region
      // Predicated region
      $region33: #{_residual_impl.1} parent=31 // pred_check
        %p178 = pneg %p31
      $region34: #{_residual_impl.1} parent=31 // pred_check_branch
        %180 = sbr.rel (%p178) target = $region36
      $region35: #{_residual_impl.1} parent=31 // pred_region
        %p181 = scmp.lt.s32.totalorder %s11, 1
        %s182 = scalar_select %p181, %s11, 1
        %s183 = smul.addr %s182, 8
        %s184 = scalar_lea.vmem %s0, %s183
      $region36: #{_residual_impl.1} parent=31 // pred_fallthru
        _
    $region32: #{_residual_impl.1} parent=5 // pred_fallthru
      _
    %p185 = scmp.le.s32.totalorder 1, %s11
    %p186 = scmp.lt.s32.totalorder %s11, 3
    %p187 = pnand %p185, %p186
    %p188 = pneg %p187
    // Predicated region
    $region37: #{_residual_impl.1} parent=5 // pred_check
      _
    $region38: #{_residual_impl.1} parent=5 // pred_check_branch
      %190 = sbr.rel (%p187) target = $region40
    $region39: #{_residual_impl.1} parent=5 // pred_region
      %s191 = ssub.s32 %s11, 1
      %p192 = scmp.lt.s32.totalorder %s16, 1
      %s193 = scalar_select %p192, %s16, 1
      %s194 = smul.addr %s193, 8
      %s195 = scalar_lea.vmem %s0, %s194
      %p196 = pneg %p37
      %p197 = pneg %p34
      %p198 = pneg %p58
      %p199 = pneg %p55
      %p200 = pneg %p79
      %p201 = pneg %p76
      %p202 = pneg %p100
      %p203 = pneg %p97
      %p204 = pneg %p121
      %p205 = pneg %p118
      %p206 = pneg %p147
      %p207 = pneg %p144
      %p208 = scmp.lt.s32.totalorder %s16, 1
      %s209 = scalar_select %p208, %s16, 1
      %s210 = smul.addr %s209, 8
      %s211 = scalar_lea.vmem %s5, %s210
      %p212 = scmp.lt.s32.totalorder %s16, 1
      %s213 = scalar_select %p212, %s16, 1
      %s214 = smul.addr %s213, 8
      %s215 = scalar_lea.vmem %s0, %s214
      %p216 = scmp.lt.s32.totalorder %s16, 1
      %s217 = scalar_select %p216, %s16, 1
      %s218 = smul.addr %s217, 8
      %s219 = scalar_lea.vmem %s5, %s218
      %v221 = vld [vmem:[%s215] sm:$0xff]
      %v222 = vpack.c.bf16 %v221, %v221
      %v223 = vld [vmem:[%s1] sm:$0xf]
      %v224 = vld [vmem:[%s1 + $0x4] sm:$0xf]
      %v225 = vld [vmem:[%s1 + $0x8] sm:$0xf]
      %v226 = vld [vmem:[%s1 + $0xc] sm:$0xf]
      %v227 = vld [vmem:[%s1 + $0x10] sm:$0xf]
      %v228 = vld [vmem:[%s1 + $0x14] sm:$0xf]
      %v229 = vld [vmem:[%s1 + $0x18] sm:$0xf]
      %v230 = vld [vmem:[%s1 + $0x1c] sm:$0xf]
      %v231 = vld [vmem:[%s1 + $0x20] sm:$0xf]
      %v232 = vld [vmem:[%s1 + $0x24] sm:$0xf]
      %v233 = vld [vmem:[%s1 + $0x28] sm:$0xf]
      %v234 = vld [vmem:[%s1 + $0x2c] sm:$0xf]
      %v235 = vld [vmem:[%s1 + $0x30] sm:$0xf]
      %v236 = vld [vmem:[%s1 + $0x34] sm:$0xf]
      %v237 = vld [vmem:[%s1 + $0x38] sm:$0xf]
      %v238 = vld [vmem:[%s1 + $0x3c] sm:$0xf]
      %v239 = vld [vmem:[%s2] sm:$0x1]
      %v241 = vlaneseq
      %v242 = vshrl.u32 %v241, 7
      %v243 = vsub.s32 0, %v242
      %v244 = vrot.slane %v239, %v243
      %v262 = vunpack.c.l.b16 %v223
      %v263 = vunpack.c.l.b16 %v224
      %v264 = vunpack.c.l.b16 %v225
      %v265 = vunpack.c.l.b16 %v226
      %v266 = vunpack.c.l.b16 %v227
      %v267 = vunpack.c.l.b16 %v228
      %v268 = vunpack.c.l.b16 %v229
      %v269 = vunpack.c.l.b16 %v230
      %v270 = vunpack.c.l.b16 %v231
      %v271 = vunpack.c.l.b16 %v232
      %v272 = vunpack.c.l.b16 %v233
      %v273 = vunpack.c.l.b16 %v234
      %v274 = vunpack.c.l.b16 %v235
      %v275 = vunpack.c.l.b16 %v236
      %v276 = vunpack.c.l.b16 %v237
      %v277 = vunpack.c.l.b16 %v238
      %v278 = vpack.c.b16 %v263, %v262
      %v279 = vpack.c.b16 %v265, %v264
      %v280 = vpack.c.b16 %v267, %v266
      %v281 = vpack.c.b16 %v269, %v268
      %v282 = vpack.c.b16 %v271, %v270
      %v283 = vpack.c.b16 %v273, %v272
      %v284 = vpack.c.b16 %v275, %v274
      %v285 = vpack.c.b16 %v277, %v276
      %294 = vmatprep.subr.bf16.mxu0 0
      %295 = vmatpush1.bf16.msra.mxu0 %v278
      %296 = vmatprep.subr.bf16.mxu0 0
      %297 = vmatpush1.bf16.msra.mxu0 %v279
      %298 = vmatprep.subr.bf16.mxu0 0
      %299 = vmatpush1.bf16.msra.mxu0 %v280
      %300 = vmatprep.subr.bf16.mxu0 0
      %301 = vmatpush1.bf16.msra.mxu0 %v281
      %302 = vmatprep.subr.bf16.mxu0 0
      %303 = vmatpush1.bf16.msra.mxu0 %v282
      %304 = vmatprep.subr.bf16.mxu0 0
      %305 = vmatpush1.bf16.msra.mxu0 %v283
      %306 = vmatprep.subr.bf16.mxu0 0
      %307 = vmatpush1.bf16.msra.mxu0 %v284
      %308 = vmatprep.subr.bf16.mxu0 0
      %309 = vmatpush1.bf16.msra.mxu0 %v285
      %310 = vmatprep.subr.bf16.mxu0 0
      %311 = vmatpush1.bf16.msra.mxu0 0
      %312 = vmatprep.subr.bf16.mxu0 0
      %313 = vmatpush1.bf16.msra.mxu0 0
      %314 = vmatprep.subr.bf16.mxu0 0
      %315 = vmatpush1.bf16.msra.mxu0 0
      %316 = vmatprep.subr.bf16.mxu0 0
      %317 = vmatpush1.bf16.msra.mxu0 0
      %318 = vmatprep.subr.bf16.mxu0 0
      %319 = vmatpush1.bf16.msra.mxu0 0
      %320 = vmatprep.subr.bf16.mxu0 0
      %321 = vmatpush1.bf16.msra.mxu0 0
      %322 = vmatprep.subr.bf16.mxu0 0
      %323 = vmatpush1.bf16.msra.mxu0 0
      %324 = vmatprep.subr.bf16.mxu0 0
      %325 = vmatpush1.bf16.msra.mxu0 0
      %326 = vmatprep.mubr.bf16.mxu0 0
      %327 = vmatmul.mubr.bf16.gmra.mrb[0].mxu0 %v222
      %v328 = vpop.f32.mrb[0].mxu0
      %v329 = vadd.f32 %v244, %v328
      %v330 = vpop.f32.mrb[0].mxu0
      %v331 = vpop.f32.mrb[0].mxu0
      %v332 = vpop.f32.mrb[0].mxu0
      %333 = vdwg.mxu0
      %v334 = vld [vmem:[%s3] sm:$0x1]
      %v335 = vld [vmem:[%s4] sm:$0x1]
      %336 = vadd.xlane.f32.xlu0 %v329
      %v337 = vpop.xlane.xlu0 %336
      %v338 = vmul.f32 %v337, 0.03125
      %v339 = vmul.f32 %v329, %v329
      %340 = vadd.xlane.f32.xlu0 %v339
      %v341 = vpop.xlane.xlu0 %340
      %v342 = vmul.f32 %v341, 0.03125
      %v343 = vmul.f32 %v338, %v338
      %v344 = vsub.f32 %v342, %v343
      %v345 = vmax.f32 %v344, 0.0
      %v346 = vsub.f32 %v329, %v338
      %v347 = vadd.f32 %v345, 1e-05
      %v348 = vrsqrt.pop %v347
      %v349 = vmul.f32 %v346, %v348
      %v351 = vlaneseq
      %v352 = vshrl.u32 %v351, 7
      %v353 = vsub.s32 0, %v352
      %v354 = vrot.slane %v334, %v353
      %v356 = vmul.f32 %v349, %v354
      %v358 = vlaneseq
      %v359 = vshrl.u32 %v358, 7
      %v360 = vsub.s32 0, %v359
      %v361 = vrot.slane %v335, %v360
      %v363 = vadd.f32 %v356, %v361
      %v364 = vadd.f32 %v221, %v363
      %365 = vst [vmem:[%s219] sm:$0xff] %v364
      %p366 = scmp.lt.s32.totalorder %s16, 1
      %s367 = scalar_select %p366, %s16, 1
      %s368 = smul.addr %s367, 8
      %s369 = scalar_lea.vmem %s5, %s368
      // Predicated region
      $region41: #{_residual_impl.1} parent=39 // pred_check
        %p370 = pneg %p144
      $region42: #{_residual_impl.1} parent=39 // pred_check_branch
        %372 = sbr.rel (%p370) target = $region44
      $region43: #{_residual_impl.1} parent=39 // pred_region
        _
      $region44: #{_residual_impl.1} parent=39 // pred_fallthru
        _
    $region40: #{_residual_impl.1} parent=5 // pred_fallthru
      _
    %p373 = scmp.le.s32.totalorder 2, %s11
    // Predicated region
    $region45: #{_residual_impl.1} parent=5 // pred_check
      %p374 = pneg %p373
    $region46: #{_residual_impl.1} parent=5 // pred_check_branch
      %376 = sbr.rel (%p374) target = $region48
    $region47: #{_residual_impl.1} parent=5 // pred_region
      %s377 = ssub.s32 %s11, 2
      // Predicated region
      $region49: #{_residual_impl.1} parent=47 // pred_check
        %p378 = pneg %p150
      $region50: #{_residual_impl.1} parent=47 // pred_check_branch
        %380 = sbr.rel (%p378) target = $region52
      $region51: #{_residual_impl.1} parent=47 // pred_region
        %p381 = scmp.lt.s32.totalorder %s17, 1
        %s382 = scalar_select %p381, %s17, 1
        %s383 = smul.addr %s382, 8
        %s384 = scalar_lea.vmem %s5, %s383
      $region52: #{_residual_impl.1} parent=47 // pred_fallthru
        _
    $region48: #{_residual_impl.1} parent=5 // pred_fallthru
      _
  $region6: #{_residual_impl.1} parent=0 // loop_footer
    %s15 = sadd.s32 1, %s11
  $region7: #{_residual_impl.1} parent=0 // loop_footer_branch
    %10 = sbr.rel target = $region3
  $region8: #{_residual_impl.1} parent=0 // loop_exit
    _

</llo_original>
